<compile_context>
chip_gen: v7x
topology: tpu7x:2x2x1
jax: 0.10.0
libtpu: 0.0.40
codegen_flags: <defaults>
</compile_context>

<pallas_src>
import math

import jax
import jax.numpy as jnp
from jax import lax
from jax.experimental import pallas as pl
from jax.experimental.pallas import tpu as pltpu

HIDDEN_LAYER = 50
N_ACTIONS = 2        # CartPole-v0 action space
N_STATES = 4         # CartPole-v0 observation space (+ XTRA_FEAT = 0)

_LANE = 128


def _make_net_kernel(b_actual: int):
    """Kernel closure: b_actual (real batch size) is baked in as a constant."""
    inv_count = 1.0 / float(b_actual * N_ACTIONS)

    def kernel(xT_ref, w1T_ref, b1_ref, whT_ref, bh_ref, o_ref):
        # fc1 + relu, feature-major: (HIDDEN, N_STATES) @ (N_STATES, Bp)
        h = jnp.dot(w1T_ref[...], xT_ref[...],
                    preferred_element_type=jnp.float32)
        h = jnp.maximum(h + b1_ref[...], 0.0)                      # (HIDDEN, Bp)

        # fused adv|val head: (3, HIDDEN) @ (HIDDEN, Bp) -> (3, Bp)
        head = jnp.dot(whT_ref[...], h,
                       preferred_element_type=jnp.float32) + bh_ref[...]

        adv = head[:N_ACTIONS, :]                                  # (2, Bp)
        val = head[N_ACTIONS:N_ACTIONS + 1, :]                     # (1, Bp)

        # global scalar mean of adv over the REAL batch columns only
        bp = adv.shape[-1]
        col = lax.broadcasted_iota(jnp.int32, (N_ACTIONS, bp), 1)
        mask = (col < b_actual).astype(jnp.float32)
        adv_mean = jnp.sum(adv * mask) * inv_count

        o_ref[...] = val + adv - adv_mean                          # (2, Bp)

    return kernel


def net_forward(x, params):
    """x: (B, N_STATES) float32 -> (B, N_ACTIONS) float32."""
    w1, b1, wa, ba, wv, bv = params
    B = x.shape[0]
    Bp = ((B + _LANE - 1) // _LANE) * _LANE                        # lane-dense pad

    # feature-major inputs, batch on the lane axis
    xT = jnp.zeros((N_STATES, Bp), jnp.float32).at[:, :B].set(x.T)
    w1T = w1.T                                                     # (HIDDEN, N_STATES)
    b1c = b1.reshape(HIDDEN_LAYER, 1)                              # (HIDDEN, 1)

    # fused head weights/bias: columns [adv_0, adv_1, val]
    whT = jnp.concatenate([wa, wv], axis=1).T                      # (3, HIDDEN)
    bhc = jnp.concatenate([ba, bv]).reshape(N_ACTIONS + 1, 1)      # (3, 1)

    vmem = pl.BlockSpec(memory_space=pltpu.MemorySpace.VMEM)
    outT = pl.pallas_call(
        _make_net_kernel(B),
        out_shape=jax.ShapeDtypeStruct((N_ACTIONS, Bp), jnp.float32),
        in_specs=[vmem] * 5,
        out_specs=vmem,
    )(xT, w1T, b1c, whT, bhc)

    return outT[:, :B].T                                           # (B, N_ACTIONS)


def init_params(key):
    """Deterministic init matching the PyTorch module's init schemes.

    fc1.weight      : kaiming_uniform_ -> U(-sqrt(6/fan_in), +)
    adv/val.weight  : xavier_uniform_  -> U(-sqrt(6/(fan_in+fan_out)), +)
    biases          : PyTorch Linear default -> U(-1/sqrt(fan_in), +)
    Weights are stored (in_features, out_features); the wrapper handles
    the feature-major transposes / head fusion.
    """
    k = jax.random.split(key, 6)

    # fc1: (N_STATES -> HIDDEN_LAYER)
    bound_w1 = math.sqrt(6.0 / N_STATES)
    w1 = jax.random.uniform(k[0], (N_STATES, HIDDEN_LAYER), jnp.float32,
                            -bound_w1, bound_w1)
    bound_b1 = 1.0 / math.sqrt(N_STATES)
    b1 = jax.random.uniform(k[1], (HIDDEN_LAYER,), jnp.float32,
                            -bound_b1, bound_b1)

    # adv: (HIDDEN_LAYER -> N_ACTIONS), xavier uniform
    bound_wa = math.sqrt(6.0 / (HIDDEN_LAYER + N_ACTIONS))
    wa = jax.random.uniform(k[2], (HIDDEN_LAYER, N_ACTIONS), jnp.float32,
                            -bound_wa, bound_wa)
    bound_head_bias = 1.0 / math.sqrt(HIDDEN_LAYER)   # fan_in = HIDDEN_LAYER
    ba = jax.random.uniform(k[3], (N_ACTIONS,), jnp.float32,
                            -bound_head_bias, bound_head_bias)

    # val: (HIDDEN_LAYER -> 1), xavier uniform
    bound_wv = math.sqrt(6.0 / (HIDDEN_LAYER + 1))
    wv = jax.random.uniform(k[4], (HIDDEN_LAYER, 1), jnp.float32,
                            -bound_wv, bound_wv)
    bv = jax.random.uniform(k[5], (1,), jnp.float32,
                            -bound_head_bias, bound_head_bias)

    return (w1, b1, wa, ba, wv, bv)


def net_forward_ref(x, params):
    """Pure-JAX reference for correctness checking."""
    w1, b1, wa, ba, wv, bv = params
    h = jnp.maximum(x @ w1 + b1, 0.0)
    adv = h @ wa + ba
    val = h @ wv + bv
    return val + adv - jnp.mean(adv)


if __name__ == "__main__":
    key = jax.random.PRNGKey(0)
    pkey, xkey = jax.random.split(key)

    params = init_params(pkey)
    x = jax.random.normal(xkey, (8, N_STATES), jnp.float32)  # batch=8 states

    out = net_forward(x, params)
    jax.block_until_ready(out)

    ref = net_forward_ref(x, params)
    assert out.shape == (8, N_ACTIONS)
    assert jnp.allclose(out, ref, atol=1e-5, rtol=1e-5)

    print("KERNEL_OK")
</pallas_src>

<mosaic_0001>
module attributes {stable_mosaic.version = 11 : i64} {
  func.func @kernel(%arg0: memref<4x128xf32, #tpu.memory_space<vmem>>, %arg1: memref<50x4xf32, #tpu.memory_space<vmem>>, %arg2: memref<50x1xf32, #tpu.memory_space<vmem>>, %arg3: memref<3x50xf32, #tpu.memory_space<vmem>>, %arg4: memref<3x1xf32, #tpu.memory_space<vmem>>, %arg5: memref<2x128xf32, #tpu.memory_space<vmem>>) attributes {dimension_semantics = [], scalar_prefetch = 0 : i64, scratch_operands = 0 : i64, tpu.core_type = #tpu.core_type<tc>} {
    %c0 = arith.constant 0 : index
    %c0_0 = arith.constant 0 : index
    %0 = vector.load %arg1[%c0, %c0_0] : memref<50x4xf32, #tpu.memory_space<vmem>>, vector<50x4xf32>
    %c0_1 = arith.constant 0 : index
    %c0_2 = arith.constant 0 : index
    %1 = vector.load %arg0[%c0_1, %c0_2] : memref<4x128xf32, #tpu.memory_space<vmem>>, vector<4x128xf32>
    %cst = arith.constant dense<0.000000e+00> : vector<50x128xf32>
    %2 = tpu.matmul %0, %1, %cst {dimension_numbers = #tpu.dot_dimension_numbers<[1], [0], [0], [1], [0, 0, 1, 1], [], []>} : vector<50x4xf32>, vector<4x128xf32>, vector<50x128xf32> -> vector<50x128xf32>
    %c0_3 = arith.constant 0 : index
    %c0_4 = arith.constant 0 : index
    %3 = vector.load %arg2[%c0_3, %c0_4] : memref<50x1xf32, #tpu.memory_space<vmem>>, vector<50x1xf32>
    %4 = vector.broadcast %3 : vector<50x1xf32> to vector<50x128xf32>
    %5 = arith.addf %2, %4 : vector<50x128xf32>
    %cst_5 = arith.constant 0.000000e+00 : f32
    %6 = vector.broadcast %cst_5 : f32 to vector<50x128xf32>
    %7 = arith.maximumf %5, %6 : vector<50x128xf32>
    %c0_6 = arith.constant 0 : index
    %c0_7 = arith.constant 0 : index
    %8 = vector.load %arg3[%c0_6, %c0_7] : memref<3x50xf32, #tpu.memory_space<vmem>>, vector<3x50xf32>
    %cst_8 = arith.constant dense<0.000000e+00> : vector<3x128xf32>
    %9 = tpu.matmul %8, %7, %cst_8 {dimension_numbers = #tpu.dot_dimension_numbers<[1], [0], [0], [1], [0, 0, 1, 1], [], []>} : vector<3x50xf32>, vector<50x128xf32>, vector<3x128xf32> -> vector<3x128xf32>
    %c0_9 = arith.constant 0 : index
    %c0_10 = arith.constant 0 : index
    %10 = vector.load %arg4[%c0_9, %c0_10] : memref<3x1xf32, #tpu.memory_space<vmem>>, vector<3x1xf32>
    %11 = vector.broadcast %10 : vector<3x1xf32> to vector<3x128xf32>
    %12 = arith.addf %9, %11 : vector<3x128xf32>
    %13 = vector.extract_strided_slice %12 {offsets = [0, 0], sizes = [2, 128], strides = [1, 1]} : vector<3x128xf32> to vector<2x128xf32>
    %14 = vector.extract_strided_slice %12 {offsets = [2, 0], sizes = [1, 128], strides = [1, 1]} : vector<3x128xf32> to vector<1x128xf32>
    %15 = tpu.iota {dimensions = array<i32: 1>} : vector<2x128xi32>
    %c8_i32 = arith.constant 8 : i32
    %16 = vector.broadcast %c8_i32 : i32 to vector<2x128xi32>
    %17 = arith.cmpi slt, %15, %16 : vector<2x128xi32>
    %18 = arith.extui %17 : vector<2x128xi1> to vector<2x128xi32>
    %19 = arith.sitofp %18 : vector<2x128xi32> to vector<2x128xf32>
    %20 = arith.mulf %13, %19 : vector<2x128xf32>
    %21 = vector.shape_cast %20 : vector<2x128xf32> to vector<1x2x128xf32>
    %cst_11 = arith.constant dense<0.000000e+00> : vector<1xf32>
    %22 = vector.multi_reduction <add>, %21, %cst_11 [1, 2] : vector<1x2x128xf32> to vector<1xf32>
    %23 = vector.shape_cast %22 : vector<1xf32> to vector<1x1x1xf32>
    %24 = vector.extract %23[0, 0, 0] : f32 from vector<1x1x1xf32>
    %cst_12 = arith.constant 6.250000e-02 : f32
    %25 = arith.mulf %24, %cst_12 : f32
    %26 = vector.broadcast %14 : vector<1x128xf32> to vector<2x128xf32>
    %27 = arith.addf %26, %13 : vector<2x128xf32>
    %28 = vector.broadcast %25 : f32 to vector<2x128xf32>
    %29 = arith.subf %27, %28 : vector<2x128xf32>
    %c0_13 = arith.constant 0 : index
    %c0_14 = arith.constant 0 : index
    %30 = vector.load %arg5[%c0_13, %c0_14] : memref<2x128xf32, #tpu.memory_space<vmem>>, vector<2x128xf32>
    tpu.vector_store %arg5[%c0_13, %c0_14], %29 {strides = array<i32>} : memref<2x128xf32, #tpu.memory_space<vmem>>, vector<2x128xf32>,
    return
  }
}

</mosaic_0001>

<llo_original>
// kernel: tpu_custom_call.1
$region0: #{tpu_custom_call.1}
  #allocation0 [shape = 'u32[]', space=smem, size = 0x4, offset = 0x4, fixed_abs, tag = 'smem constant byte address 0x4 - core index']
  #allocation1 [shape = 'u32[144,128]{1,0:T(1,128)}', space=vmem, size = 0x12000, scoped, tag = 'internal scratch']
  %s0 = inlined_call_operand.vmem [shape: f32[4,128], index: 0, kind: input, shape index: {}]
  %s1 = inlined_call_operand.vmem [shape: f32[50,4], index: 1, kind: input, shape index: {}]
  %s2 = inlined_call_operand.vmem [shape: f32[50,1], index: 2, kind: input, shape index: {}]
  %s3 = inlined_call_operand.vmem [shape: f32[3,50], index: 3, kind: input, shape index: {}]
  %s4 = inlined_call_operand.vmem [shape: f32[3,1], index: 4, kind: input, shape index: {}]
  %s5 = inlined_call_operand.hbm [shape: f32[2,128], index: 5, kind: output, shape index: {}]
  %s6 = sld [smem:[#allocation0]]
  $region30: #{tpu_custom_call.1} parent=0
    _
  %s8 = ssub.s32 1, %s6
  %s9 = scalar_select 0, %s8, %s6
  $region1: #{tpu_custom_call.1} parent=0
    #allocation2 [shape = 'u8[1024]{0}', space=vmem, size = 0x400, scoped, tag = 'output window, operand 0, single buffered']
    #allocation3 [shape = 's32[1]{0}', space=sflag, size = 0x4, scoped, tag = 'scoped memory for tpu_custom_call.1']
    %10 = vsyncpa [#allocation3], 0
    // Predicated region
    $region2: #{tpu_custom_call.1} parent=1 // pred_check
      _
    $region3: #{tpu_custom_call.1} parent=1 // pred_check_branch
      %12 = sbr.rel (0) target = $region5
    $region4: #{tpu_custom_call.1} parent=1 // pred_region
      _
    $region5: #{tpu_custom_call.1} parent=1 // pred_fallthru
      _
    // Predicated region
    $region6: #{tpu_custom_call.1} parent=1 // pred_check
      _
    $region7: #{tpu_custom_call.1} parent=1 // pred_check_branch
      %14 = sbr.rel (0) target = $region9
    $region8: #{tpu_custom_call.1} parent=1 // pred_region
      _
    $region9: #{tpu_custom_call.1} parent=1 // pred_fallthru
      _
    // Predicated region
    $region10: #{tpu_custom_call.1} parent=1 // pred_check
      _
    $region11: #{tpu_custom_call.1} parent=1 // pred_check_branch
      %16 = sbr.rel (0) target = $region13
    $region12: #{tpu_custom_call.1} parent=1 // pred_region
      _
    $region13: #{tpu_custom_call.1} parent=1 // pred_fallthru
      _
    // Predicated region
    $region14: #{tpu_custom_call.1} parent=1 // pred_check
      _
    $region15: #{tpu_custom_call.1} parent=1 // pred_check_branch
      %18 = sbr.rel (0) target = $region17
    $region16: #{tpu_custom_call.1} parent=1 // pred_region
      _
    $region17: #{tpu_custom_call.1} parent=1 // pred_fallthru
      _
    // Predicated region
    $region18: #{tpu_custom_call.1} parent=1 // pred_check
      _
    $region19: #{tpu_custom_call.1} parent=1 // pred_check_branch
      %20 = sbr.rel (0) target = $region21
    $region20: #{tpu_custom_call.1} parent=1 // pred_region
      _
    $region21: #{tpu_custom_call.1} parent=1 // pred_fallthru
      _
    %v21 = vld [vmem:[%s1] sm:$0xff]
    %v22 = vld [vmem:[%s1 + $0x8] sm:$0xff]
    %v23 = vld [vmem:[%s1 + $0x10] sm:$0xff]
    %v24 = vld [vmem:[%s1 + $0x18] sm:$0xff]
    %v25 = vld [vmem:[%s1 + $0x20] sm:$0xff]
    %v26 = vld [vmem:[%s1 + $0x28] sm:$0xff]
    %v27 = vld [vmem:[%s1 + $0x30] sm:$0x3]
    %v28 = vld [vmem:[%s0] sm:$0xf]
    %v29 = vld [vmem:[%s2] sm:$0xff]
    %v30 = vld [vmem:[%s2 + $0x8] sm:$0xff]
    %v31 = vld [vmem:[%s2 + $0x10] sm:$0xff]
    %v32 = vld [vmem:[%s2 + $0x18] sm:$0xff]
    %v33 = vld [vmem:[%s2 + $0x20] sm:$0xff]
    %v34 = vld [vmem:[%s2 + $0x28] sm:$0xff]
    %v35 = vld [vmem:[%s2 + $0x30] sm:$0x3]
    %37 = vset.pattern.permute.xlu0 0
    %38 = vperm.xlu0 %37, %v29
    %v39 = vpop.permute.xlu0 %38
    %42 = vset.pattern.permute.xlu0 0
    %43 = vperm.xlu0 %42, %v30
    %v44 = vpop.permute.xlu0 %43
    %47 = vset.pattern.permute.xlu0 0
    %48 = vperm.xlu0 %47, %v31
    %v49 = vpop.permute.xlu0 %48
    %52 = vset.pattern.permute.xlu0 0
    %53 = vperm.xlu0 %52, %v32
    %v54 = vpop.permute.xlu0 %53
    %57 = vset.pattern.permute.xlu0 0
    %58 = vperm.xlu0 %57, %v33
    %v59 = vpop.permute.xlu0 %58
    %62 = vset.pattern.permute.xlu0 0
    %63 = vperm.xlu0 %62, %v34
    %v64 = vpop.permute.xlu0 %63
    %67 = vset.pattern.permute.xlu0 0
    %68 = vperm.xlu0 %67, %v35
    %v69 = vpop.permute.xlu0 %68
    %vm71 = vcmask 31744
    %v73 = vsel %vm71, %v21, 0
    %v76 = vsel %vm71, %v22, 0
    %v79 = vsel %vm71, %v23, 0
    %v82 = vsel %vm71, %v24, 0
    %v85 = vsel %vm71, %v25, 0
    %v88 = vsel %vm71, %v26, 0
    %v91 = vsel %vm71, %v27, 0
    %vm93 = vcmask 1043456
    %v95 = vsel %vm93, %v28, 0
    %97 = vmatprep.subr.mxu0 0.0
    %98 = vmatpush1.msra.mxu0 %v95
    %99 = vmatprep.subr.mxu0 0.0
    %100 = vmatpush1.msra.mxu0 0.0
    %101 = vmatprep.subr.mxu0 0.0
    %102 = vmatpush1.msra.mxu0 0.0
    %103 = vmatprep.subr.mxu0 0.0
    %104 = vmatpush1.msra.mxu0 0.0
    %105 = vmatprep.subr.mxu0 0.0
    %106 = vmatpush1.msra.mxu0 0.0
    %107 = vmatprep.subr.mxu0 0.0
    %108 = vmatpush1.msra.mxu0 0.0
    %109 = vmatprep.subr.mxu0 0.0
    %110 = vmatpush1.msra.mxu0 0.0
    %111 = vmatprep.subr.mxu0 0.0
    %112 = vmatpush1.msra.mxu0 0.0
    %113 = vmatprep.subr.mxu0 0.0
    %114 = vmatpush1.msra.mxu0 0.0
    %115 = vmatprep.subr.mxu0 0.0
    %116 = vmatpush1.msra.mxu0 0.0
    %117 = vmatprep.subr.mxu0 0.0
    %118 = vmatpush1.msra.mxu0 0.0
    %119 = vmatprep.subr.mxu0 0.0
    %120 = vmatpush1.msra.mxu0 0.0
    %121 = vmatprep.subr.mxu0 0.0
    %122 = vmatpush1.msra.mxu0 0.0
    %123 = vmatprep.subr.mxu0 0.0
    %124 = vmatpush1.msra.mxu0 0.0
    %125 = vmatprep.subr.mxu0 0.0
    %126 = vmatpush1.msra.mxu0 0.0
    %127 = vmatprep.subr.mxu0 0.0
    %128 = vmatpush1.msra.mxu0 0.0
    %129 = vmatprep.subr.mxu0 0.0
    %130 = vmatpush1.msra.mxu0 0.0
    %131 = vmatprep.subr.mxu0 0.0
    %132 = vmatpush1.msra.mxu0 0.0
    %133 = vmatprep.subr.mxu0 0.0
    %134 = vmatpush1.msra.mxu0 0.0
    %135 = vmatprep.subr.mxu0 0.0
    %136 = vmatpush1.msra.mxu0 0.0
    %137 = vmatprep.subr.mxu0 0.0
    %138 = vmatpush1.msra.mxu0 0.0
    %139 = vmatprep.subr.mxu0 0.0
    %140 = vmatpush1.msra.mxu0 0.0
    %141 = vmatprep.subr.mxu0 0.0
    %142 = vmatpush1.msra.mxu0 0.0
    %143 = vmatprep.subr.mxu0 0.0
    %144 = vmatpush1.msra.mxu0 0.0
    %145 = vmatprep.subr.mxu0 0.0
    %146 = vmatpush1.msra.mxu0 0.0
    %147 = vmatprep.subr.mxu0 0.0
    %148 = vmatpush1.msra.mxu0 0.0
    %149 = vmatprep.subr.mxu0 0.0
    %150 = vmatpush1.msra.mxu0 0.0
    %151 = vmatprep.subr.mxu0 0.0
    %152 = vmatpush1.msra.mxu0 0.0
    %153 = vmatprep.subr.mxu0 0.0
    %154 = vmatpush1.msra.mxu0 0.0
    %155 = vmatprep.subr.mxu0 0.0
    %156 = vmatpush1.msra.mxu0 0.0
    %157 = vmatprep.subr.mxu0 0.0
    %158 = vmatpush1.msra.mxu0 0.0
    %159 = vmatprep.subr.mxu0 0.0
    %160 = vmatpush1.msra.mxu0 0.0
    %161 = vmatprep.mubr.f32.mxu0 0.0
    %162 = vmatmul.mubr.f32.gmra.mrb[0].mxu0 %v73
    %v163 = vpop.f32.mrb[0].mxu0
    %v164 = vadd.f32 %v39, %v163
    %v165 = vpop.f32.mrb[0].mxu0
    %166 = vmatprep.mubr.f32.mxu0 0.0
    %167 = vmatmul.mubr.f32.gmra.mrb[0].mxu0 %v76
    %v168 = vpop.f32.mrb[0].mxu0
    %v169 = vadd.f32 %v44, %v168
    %v170 = vpop.f32.mrb[0].mxu0
    %171 = vmatprep.mubr.f32.mxu0 0.0
    %172 = vmatmul.mubr.f32.gmra.mrb[0].mxu0 %v79
    %v173 = vpop.f32.mrb[0].mxu0
    %v174 = vadd.f32 %v49, %v173
    %v175 = vpop.f32.mrb[0].mxu0
    %176 = vmatprep.mubr.f32.mxu0 0.0
    %177 = vmatmul.mubr.f32.gmra.mrb[0].mxu0 %v82
    %v178 = vpop.f32.mrb[0].mxu0
    %v179 = vadd.f32 %v54, %v178
    %v180 = vpop.f32.mrb[0].mxu0
    %181 = vmatprep.mubr.f32.mxu0 0.0
    %182 = vmatmul.mubr.f32.gmra.mrb[0].mxu0 %v85
    %v183 = vpop.f32.mrb[0].mxu0
    %v184 = vadd.f32 %v59, %v183
    %v185 = vpop.f32.mrb[0].mxu0
    %186 = vmatprep.mubr.f32.mxu0 0.0
    %187 = vmatmul.mubr.f32.gmra.mrb[0].mxu0 %v88
    %v188 = vpop.f32.mrb[0].mxu0
    %v189 = vadd.f32 %v64, %v188
    %v190 = vpop.f32.mrb[0].mxu0
    %191 = vmatprep.mubr.f32.mxu0 0.0
    %192 = vmatmul.mubr.f32.gmra.mrb[0].mxu0 %v91
    %v193 = vpop.f32.mrb[0].mxu0
    %v194 = vadd.f32 %v69, %v193
    %v195 = vpop.f32.mrb[0].mxu0
    %196 = vdwg.mxu0
    %v197 = vmax.f32 %v164, 0.0
    %v198 = vmax.f32 %v169, 0.0
    %v199 = vmax.f32 %v174, 0.0
    %v200 = vmax.f32 %v179, 0.0
    %v201 = vmax.f32 %v184, 0.0
    %v202 = vmax.f32 %v189, 0.0
    %v203 = vmax.f32 %v194, 0.0
    %v204 = vld [vmem:[%s3] sm:$0x7]
    %v205 = vld [vmem:[%s4] sm:$0x7]
    %207 = vset.pattern.permute.xlu0 0
    %208 = vperm.xlu0 %207, %v205
    %v209 = vpop.permute.xlu0 %208
    %vm211 = vcmask 408576
    %v213 = vsel %vm211, %v204, 0
    %vm215 = vcmask 1041408
    %v217 = vsel %vm215, %v203, 0
    %219 = vmatprep.subr.mxu0 0.0
    %220 = vmatpush1.msra.mxu0 %v197
    %221 = vmatprep.subr.mxu0 0.0
    %222 = vmatpush1.msra.mxu0 %v198
    %223 = vmatprep.subr.mxu0 0.0
    %224 = vmatpush1.msra.mxu0 %v199
    %225 = vmatprep.subr.mxu0 0.0
    %226 = vmatpush1.msra.mxu0 %v200
    %227 = vmatprep.subr.mxu0 0.0
    %228 = vmatpush1.msra.mxu0 %v201
    %229 = vmatprep.subr.mxu0 0.0
    %230 = vmatpush1.msra.mxu0 %v202
    %231 = vmatprep.subr.mxu0 0.0
    %232 = vmatpush1.msra.mxu0 %v217
    %233 = vmatprep.subr.mxu0 0.0
    %234 = vmatpush1.msra.mxu0 0.0
    %235 = vmatprep.subr.mxu0 0.0
    %236 = vmatpush1.msra.mxu0 0.0
    %237 = vmatprep.subr.mxu0 0.0
    %238 = vmatpush1.msra.mxu0 0.0
    %239 = vmatprep.subr.mxu0 0.0
    %240 = vmatpush1.msra.mxu0 0.0
    %241 = vmatprep.subr.mxu0 0.0
    %242 = vmatpush1.msra.mxu0 0.0
    %243 = vmatprep.subr.mxu0 0.0
    %244 = vmatpush1.msra.mxu0 0.0
    %245 = vmatprep.subr.mxu0 0.0
    %246 = vmatpush1.msra.mxu0 0.0
    %247 = vmatprep.subr.mxu0 0.0
    %248 = vmatpush1.msra.mxu0 0.0
    %249 = vmatprep.subr.mxu0 0.0
    %250 = vmatpush1.msra.mxu0 0.0
    %251 = vmatprep.subr.mxu0 0.0
    %252 = vmatpush1.msra.mxu0 0.0
    %253 = vmatprep.subr.mxu0 0.0
    %254 = vmatpush1.msra.mxu0 0.0
    %255 = vmatprep.subr.mxu0 0.0
    %256 = vmatpush1.msra.mxu0 0.0
    %257 = vmatprep.subr.mxu0 0.0
    %258 = vmatpush1.msra.mxu0 0.0
    %259 = vmatprep.subr.mxu0 0.0
    %260 = vmatpush1.msra.mxu0 0.0
    %261 = vmatprep.subr.mxu0 0.0
    %262 = vmatpush1.msra.mxu0 0.0
    %263 = vmatprep.subr.mxu0 0.0
    %264 = vmatpush1.msra.mxu0 0.0
    %265 = vmatprep.subr.mxu0 0.0
    %266 = vmatpush1.msra.mxu0 0.0
    %267 = vmatprep.subr.mxu0 0.0
    %268 = vmatpush1.msra.mxu0 0.0
    %269 = vmatprep.subr.mxu0 0.0
    %270 = vmatpush1.msra.mxu0 0.0
    %271 = vmatprep.subr.mxu0 0.0
    %272 = vmatpush1.msra.mxu0 0.0
    %273 = vmatprep.subr.mxu0 0.0
    %274 = vmatpush1.msra.mxu0 0.0
    %275 = vmatprep.subr.mxu0 0.0
    %276 = vmatpush1.msra.mxu0 0.0
    %277 = vmatprep.subr.mxu0 0.0
    %278 = vmatpush1.msra.mxu0 0.0
    %279 = vmatprep.subr.mxu0 0.0
    %280 = vmatpush1.msra.mxu0 0.0
    %281 = vmatprep.subr.mxu0 0.0
    %282 = vmatpush1.msra.mxu0 0.0
    %283 = vmatprep.mubr.f32.mxu0 0.0
    %284 = vmatmul.mubr.f32.gmra.mrb[0].mxu0 %v213
    %v285 = vpop.f32.mrb[0].mxu0
    %v286 = vadd.f32 %v209, %v285
    %v287 = vpop.f32.mrb[0].mxu0
    %288 = vdwg.mxu0
    %v289 = vlaneseq
    %v290 = vand.u32 %v289, 127
    %vm291 = vcmp.lt.s32.totalorder %v290, 8
    %v292 = vsel %vm291, 1, 0
    %v293 = vcvt.s32.f32 %v292
    %v294 = vmul.f32 %v286, %v293
    %v295 = vsel %vm215, %v294, 0.0
    %296 = vadd.xlane.f32.xlu0 %v295
    %v297 = vpop.xlane.xlu0 %296
    %v298 = vrot.slane %v297, 4
    %v299 = vadd.f32 %v297, %v298
    %v300 = vrot.slane %v299, 2
    %v301 = vadd.f32 %v299, %v300
    %v302 = vrot.slane %v301, 1
    %v303 = vadd.f32 %v301, %v302
    %s304 = vtos %v303
    %s305 = smul.f32 %s304, 0.0625
    %v306 = vlaneseq
    %v307 = vshrl.u32 %v306, 7
    %v308 = vsub.s32 2, %v307
    %v309 = vrot.slane %v286, %v308
    %v310 = vadd.f32 %v309, %v286
    %v311 = vstv %s305
    %v312 = vsub.f32 %v310, %v311
    %313 = vst [vmem:[#allocation2] sm:$0x3] %v312
    // Predicated region
    $region22: #{tpu_custom_call.1} parent=1 // pred_check
      _
    $region23: #{tpu_custom_call.1} parent=1 // pred_check_branch
      %315 = sbr.rel (0) target = $region25
    $region24: #{tpu_custom_call.1} parent=1 // pred_region
      %s317 = ssub.s32 32, 32
      %318 = vsyncadd [#allocation3], %s317
      %s320 = sshll.u32 [#allocation2], 4
      %s321 = int_to_ptr.vmem [resolvable:$true] %s320
      %323 = dma.vmem_to_hbm [thread:$0]  %s321, 32, %s5, [#allocation3]
    $region25: #{tpu_custom_call.1} parent=1 // pred_fallthru
      _
    // Predicated region
    $region26: #{tpu_custom_call.1} parent=1 // pred_check
      _
    $region27: #{tpu_custom_call.1} parent=1 // pred_check_branch
      %325 = sbr.rel (0) target = $region29
    $region28: #{tpu_custom_call.1} parent=1 // pred_region
      %326 = dma.done [#allocation3], 32
    $region29: #{tpu_custom_call.1} parent=1 // pred_fallthru
      _
    %327 = vsyncpa [#allocation3], 1

</llo_original>
